<compile_context>
chip_gen: v7x
topology: tpu7x:2x2x1
jax: 0.10.0
libtpu: 0.0.40
codegen_flags: <defaults>
</compile_context>

<pallas_src>
import functools
import math

import jax
import jax.numpy as jnp
from jax.experimental import pallas as pl
from jax.experimental.pallas import tpu as pltpu


_LANE = 128           # lane width: last-dim alignment
_SUBLANE_BF16 = 16    # bf16 vregs pack [16, 128]: batch-tile alignment
_K_TILE = 512         # reduction tile for the (possibly very wide) first layer
_MAX_BATCH_TILE = 256 # rows per batch tile


def _round_up(x, m):
    return ((x + m - 1) // m) * m


def _pad_first_in_dim(din):
    """Padded first-layer input width, chosen so it splits evenly into K tiles."""
    if din <= _K_TILE:
        return _round_up(din, _LANE)
    return _round_up(din, _K_TILE)


def _apply_act(y, act):
    """Activation epilogue in f32."""
    if act == "elu":
        # ELU(alpha=1).  Clamp the exp argument so the untaken branch cannot
        # overflow to inf for large positive y.
        return jnp.where(y > 0.0, y, jnp.exp(jnp.minimum(y, 0.0)) - 1.0)
    if act == "sigmoid":
        # exp + vrcp run on the EUP; clamp guards approx-reciprocal rounding.
        r = pl.reciprocal(1.0 + jnp.exp(-y), approx=True)
        return jnp.clip(r, 0.0, 1.0)
    if act == "none":
        return y
    raise ValueError(act)


def _snn_fused_kernel(*refs, activations):
    """Entire SNN forward for one batch tile.

    Grid = (batch_tiles, k_tiles); k (last, "arbitrary") tiles the first
    layer's input width, batch (first, "parallel") tiles the rows.

    refs = (x_ref, w0, b0, w1, b1, ..., w_{L-1}, b_{L-1}, o_ref, acc_ref)
      x_ref : (TB, tk)                 bf16  (current batch/K tile of input)
      w0    : (tk, D1_pad)             bf16  (current K tile of layer-0 weight)
      w_l   : (Din_l_pad, Dout_l_pad)  bf16  (pre-transposed, VMEM-resident)
      b_l   : (1, Dout_l_pad)          f32
      o_ref : (TB, Dout_last_pad)      f32
      acc_ref: (TB, D1_pad)            f32 scratch (layer-0 K accumulator)
    """
    n_layers = len(activations)
    x_ref = refs[0]
    wb_refs = refs[1:1 + 2 * n_layers]
    o_ref = refs[1 + 2 * n_layers]
    acc_ref = refs[2 + 2 * n_layers]

    k = pl.program_id(1)
    nk = pl.num_programs(1)

    @pl.when(k == 0)
    def _():
        acc_ref[...] = jnp.zeros_like(acc_ref)

    # Layer-0 partial product for this K tile (bf16 MXU, f32 accumulate).
    acc_ref[...] += jnp.dot(x_ref[...], wb_refs[0][...],
                            preferred_element_type=jnp.float32)

    @pl.when(k == nk - 1)
    def _():
        h = None
        y = acc_ref[...] + wb_refs[1][...]
        for l in range(n_layers):
            if l > 0:
                w = wb_refs[2 * l][...]
                b = wb_refs[2 * l + 1][...]
                y = jnp.dot(h, w, preferred_element_type=jnp.float32) + b
            y = _apply_act(y, activations[l])
            # AlphaDropout(p=0.25): identity in eval mode.
            if l < n_layers - 1:
                # Carry the inter-layer activation in bf16: one cast per layer,
                # half the live footprint, bit-identical MXU inputs.
                h = y.astype(jnp.bfloat16)
        o_ref[...] = y.astype(o_ref.dtype)


def init_snn_params(key, omic_input_dim, n_classes, mlp_depth,
                    feature_extractor=False):
    """Deterministic init matching init_max_weights:
         W ~ N(0, 1/sqrt(in_dim)), b = 0.
       Weights are stored pre-transposed (Din, Dout), zero-padded to lane
       multiples (first-layer Din padded to the K-tile), and cast to bf16."""
    hidden = [omic_input_dim] + [256] * (mlp_depth - 1)
    if feature_extractor:
        hidden.append(n_classes)

    # (din, dout, activation) for every fused layer, in order.
    layer_dims = [(hidden[i], hidden[i + 1], "elu")
                  for i in range(len(hidden) - 1)]
    if not feature_extractor:
        layer_dims.append((hidden[-1], n_classes, "sigmoid"))

    layers = []
    for li, (din, dout, act) in enumerate(layer_dims):
        key, sub = jax.random.split(key)
        stdv = 1.0 / math.sqrt(din)
        # PyTorch layout (dout, din) for the random draw, then transpose once.
        w = jax.random.normal(sub, (dout, din), dtype=jnp.float32) * stdv
        b = jnp.zeros((dout,), dtype=jnp.float32)

        din_p = _pad_first_in_dim(din) if li == 0 else _round_up(din, _LANE)
        dout_p = _round_up(dout, _LANE)
        w_pad = jnp.zeros((din_p, dout_p), jnp.float32).at[:din, :dout].set(w.T)
        w_pad = w_pad.astype(jnp.bfloat16)
        b_pad = jnp.zeros((1, dout_p), jnp.float32).at[0, :dout].set(b)
        layers.append((w_pad, b_pad, act))

    return {
        "layers": layers,
        "in_dim": omic_input_dim,
        "out_dim": n_classes,   # logical output width in both modes
        "feature_extractor": feature_extractor,
    }


def snn_forward(params, x):
    """x: (B, omic_input_dim) f32 -> (B, n_classes) hazards (or feats)."""
    B, Din = x.shape
    layers = params["layers"]
    out_dim = params["out_dim"]

    Din_pad = layers[0][0].shape[0]
    D1_pad = layers[0][0].shape[1]
    Dout_last_pad = layers[-1][0].shape[1]

    # --- tiling ---------------------------------------------------------
    tk = min(Din_pad, _K_TILE)
    nk = Din_pad // tk

    B16 = _round_up(max(B, _SUBLANE_BF16), _SUBLANE_BF16)
    TB = min(B16, _MAX_BATCH_TILE)
    B_pad = _round_up(B16, TB)
    nb = B_pad // TB

    # Pad and cast the input to bf16 once in the wrapper: matches the MXU
    # input dtype and halves the x HBM->VMEM traffic.
    x_pad = jnp.zeros((B_pad, Din_pad), jnp.bfloat16).at[:B, :Din].set(
        x.astype(jnp.bfloat16))

    flat_params, acts = [], []
    for (w, b, act) in layers:
        flat_params += [w, b]
        acts.append(act)

    kernel = functools.partial(_snn_fused_kernel, activations=tuple(acts))

    # --- block specs ------------------------------------------------------
    in_specs = [pl.BlockSpec((TB, tk), lambda i, k: (i, k))]          # x
    for li, (w, b, _) in enumerate(layers):
        if li == 0:
            # Layer-0 weight streamed in K tiles (reduction axis).
            in_specs.append(pl.BlockSpec((tk, w.shape[1]),
                                         lambda i, k: (k, 0)))
        else:
            # Other weights: one block, constant index -> DMA'd once, resident.
            in_specs.append(pl.BlockSpec(w.shape, lambda i, k: (0, 0)))
        in_specs.append(pl.BlockSpec(b.shape, lambda i, k: (0, 0)))
    out_specs = pl.BlockSpec((TB, Dout_last_pad), lambda i, k: (i, 0))

    # --- cost estimate + scoped VMEM sizing -------------------------------
    flops = 2 * B_pad * sum(w.shape[0] * w.shape[1] for (w, _, _) in layers)
    transcendentals = B_pad * sum(w.shape[1] for (w, _, a) in layers
                                  if a in ("elu", "sigmoid"))
    bytes_accessed = (x_pad.size * 2
                      + sum(w.size * 2 + b.size * 4 for (w, b, _) in layers)
                      + B_pad * Dout_last_pad * 4)

    weight_bytes = sum(w.size * 2 + b.size * 4 for (w, b, _) in layers)
    tile_bytes = 2 * (TB * tk * 2) + 2 * (TB * Dout_last_pad * 4)   # dbl-buffered
    acc_bytes = TB * D1_pad * 4
    act_slack = 4 * (TB * max(D1_pad, Dout_last_pad) * 4)
    needed = weight_bytes + tile_bytes + acc_bytes + act_slack
    vmem_limit = int(min(max(needed + needed // 2, 32 * 1024 * 1024),
                         64 * 1024 * 1024))

    out_pad = pl.pallas_call(
        kernel,
        out_shape=jax.ShapeDtypeStruct((B_pad, Dout_last_pad), jnp.float32),
        grid_spec=pltpu.PrefetchScalarGridSpec(
            num_scalar_prefetch=0,
            grid=(nb, nk),
            in_specs=in_specs,
            out_specs=out_specs,
            scratch_shapes=[pltpu.VMEM((TB, D1_pad), jnp.float32)],
        ),
        compiler_params=pltpu.CompilerParams(
            dimension_semantics=("parallel", "arbitrary"),
            vmem_limit_bytes=vmem_limit,
        ),
        cost_estimate=pl.CostEstimate(
            flops=flops,
            transcendentals=transcendentals,
            bytes_accessed=bytes_accessed,
        ),
    )(x_pad, *flat_params)

    return out_pad[:B, :out_dim]


if __name__ == "__main__":
    key = jax.random.PRNGKey(0)
    k_param, k_x = jax.random.split(key)

    batch = 4
    omic_input_dim = 64
    n_classes = 4
    mlp_depth = 3

    params = init_snn_params(k_param, omic_input_dim, n_classes, mlp_depth,
                             feature_extractor=False)
    x = jax.random.normal(k_x, (batch, omic_input_dim), dtype=jnp.float32)

    hazards = snn_forward(params, x)
    hazards = jax.block_until_ready(hazards)

    assert hazards.shape == (batch, n_classes)
    assert bool(jnp.all(jnp.isfinite(hazards)))
    assert bool(jnp.all((hazards >= 0.0) & (hazards <= 1.0)))
    print("KERNEL_OK")
</pallas_src>

<mosaic_0001>
module attributes {stable_mosaic.version = 11 : i64} {
  func.func @_snn_fused_kernel(%arg0: i32, %arg1: i32, %arg2: memref<16x128xbf16, #tpu.memory_space<vmem>>, %arg3: memref<128x256xbf16, #tpu.memory_space<vmem>>, %arg4: memref<1x256xf32, #tpu.memory_space<vmem>>, %arg5: memref<256x256xbf16, #tpu.memory_space<vmem>>, %arg6: memref<1x256xf32, #tpu.memory_space<vmem>>, %arg7: memref<256x128xbf16, #tpu.memory_space<vmem>>, %arg8: memref<1x128xf32, #tpu.memory_space<vmem>>, %arg9: memref<16x128xf32, #tpu.memory_space<vmem>>, %arg10: memref<16x256xf32, #tpu.memory_space<vmem>>) attributes {dimension_semantics = [#tpu.dimension_semantics<parallel>, #tpu.dimension_semantics<arbitrary>], iteration_bounds = array<i64: 1, 1>, scalar_prefetch = 0 : i64, scratch_operands = 1 : i64, tpu.core_type = #tpu.core_type<tc>, window_params = [{transform_indices = @transform_0, window_bounds = array<i64: 16, 128>}, {transform_indices = @transform_1, window_bounds = array<i64: 128, 256>}, {pipeline_mode = #tpu.pipeline_mode<synchronous>, transform_indices = @transform_2, window_bounds = array<i64: 1, 256>}, {pipeline_mode = #tpu.pipeline_mode<synchronous>, transform_indices = @transform_3, window_bounds = array<i64: 256, 256>}, {pipeline_mode = #tpu.pipeline_mode<synchronous>, transform_indices = @transform_4, window_bounds = array<i64: 1, 256>}, {pipeline_mode = #tpu.pipeline_mode<synchronous>, transform_indices = @transform_5, window_bounds = array<i64: 256, 128>}, {pipeline_mode = #tpu.pipeline_mode<synchronous>, transform_indices = @transform_6, window_bounds = array<i64: 1, 128>}, {transform_indices = @transform_7, window_bounds = array<i64: 16, 128>}]} {
    %c0_i32 = arith.constant 0 : i32
    %0 = arith.cmpi eq, %arg1, %c0_i32 : i32
    %1 = arith.extui %0 : i1 to i32
    %c0_i32_0 = arith.constant 0 : i32
    %2 = arith.cmpi ne, %1, %c0_i32_0 : i32
    scf.if %2 {
      %cst_10 = arith.constant 0.000000e+00 : f32
      %12 = vector.broadcast %cst_10 : f32 to vector<16x256xf32>
      %c0_11 = arith.constant 0 : index
      %c0_12 = arith.constant 0 : index
      %13 = vector.load %arg10[%c0_11, %c0_12] : memref<16x256xf32, #tpu.memory_space<vmem>>, vector<16x256xf32>
      tpu.vector_store %arg10[%c0_11, %c0_12], %12 {strides = array<i32>} : memref<16x256xf32, #tpu.memory_space<vmem>>, vector<16x256xf32>,
    } else {
    }
    %c0 = arith.constant 0 : index
    %c0_1 = arith.constant 0 : index
    %3 = vector.load %arg10[%c0, %c0_1] : memref<16x256xf32, #tpu.memory_space<vmem>>, vector<16x256xf32>
    %c0_2 = arith.constant 0 : index
    %c0_3 = arith.constant 0 : index
    %4 = vector.load %arg2[%c0_2, %c0_3] : memref<16x128xbf16, #tpu.memory_space<vmem>>, vector<16x128xbf16>
    %c0_4 = arith.constant 0 : index
    %c0_5 = arith.constant 0 : index
    %5 = vector.load %arg3[%c0_4, %c0_5] : memref<128x256xbf16, #tpu.memory_space<vmem>>, vector<128x256xbf16>
    %cst = arith.constant dense<0.000000e+00> : vector<16x256xf32>
    %6 = tpu.matmul %4, %5, %cst {dimension_numbers = #tpu.dot_dimension_numbers<[1], [0], [0], [1], [0, 0, 1, 1], [], []>} : vector<16x128xbf16>, vector<128x256xbf16>, vector<16x256xf32> -> vector<16x256xf32>
    %7 = arith.addf %3, %6 : vector<16x256xf32>
    %c0_6 = arith.constant 0 : index
    %c0_7 = arith.constant 0 : index
    %8 = vector.load %arg10[%c0_6, %c0_7] : memref<16x256xf32, #tpu.memory_space<vmem>>, vector<16x256xf32>
    tpu.vector_store %arg10[%c0_6, %c0_7], %7 {strides = array<i32>} : memref<16x256xf32, #tpu.memory_space<vmem>>, vector<16x256xf32>,
    %c0_i32_8 = arith.constant 0 : i32
    %9 = arith.cmpi eq, %arg1, %c0_i32_8 : i32
    %10 = arith.extui %9 : i1 to i32
    %c0_i32_9 = arith.constant 0 : i32
    %11 = arith.cmpi ne, %10, %c0_i32_9 : i32
    scf.if %11 {
      %c0_10 = arith.constant 0 : index
      %c0_11 = arith.constant 0 : index
      %12 = vector.load %arg10[%c0_10, %c0_11] : memref<16x256xf32, #tpu.memory_space<vmem>>, vector<16x256xf32>
      %c0_12 = arith.constant 0 : index
      %c0_13 = arith.constant 0 : index
      %13 = vector.load %arg4[%c0_12, %c0_13] : memref<1x256xf32, #tpu.memory_space<vmem>>, vector<1x256xf32>
      %14 = vector.broadcast %13 : vector<1x256xf32> to vector<16x256xf32>
      %15 = arith.addf %12, %14 : vector<16x256xf32>
      %cst_14 = arith.constant 0.000000e+00 : f32
      %16 = vector.broadcast %cst_14 : f32 to vector<16x256xf32>
      %17 = arith.cmpf ogt, %15, %16 : vector<16x256xf32>
      %cst_15 = arith.constant 0.000000e+00 : f32
      %18 = vector.broadcast %cst_15 : f32 to vector<16x256xf32>
      %19 = arith.minimumf %15, %18 : vector<16x256xf32>
      %20 = math.exp %19 : vector<16x256xf32>
      %cst_16 = arith.constant 1.000000e+00 : f32
      %21 = vector.broadcast %cst_16 : f32 to vector<16x256xf32>
      %22 = arith.subf %20, %21 : vector<16x256xf32>
      %23 = arith.select %17, %15, %22 : vector<16x256xi1>, vector<16x256xf32>
      %24 = arith.truncf %23 : vector<16x256xf32> to vector<16x256xbf16>
      %c0_17 = arith.constant 0 : index
      %c0_18 = arith.constant 0 : index
      %25 = vector.load %arg5[%c0_17, %c0_18] : memref<256x256xbf16, #tpu.memory_space<vmem>>, vector<256x256xbf16>
      %c0_19 = arith.constant 0 : index
      %c0_20 = arith.constant 0 : index
      %26 = vector.load %arg6[%c0_19, %c0_20] : memref<1x256xf32, #tpu.memory_space<vmem>>, vector<1x256xf32>
      %cst_21 = arith.constant dense<0.000000e+00> : vector<16x256xf32>
      %27 = tpu.matmul %24, %25, %cst_21 {dimension_numbers = #tpu.dot_dimension_numbers<[1], [0], [0], [1], [0, 0, 1, 1], [], []>} : vector<16x256xbf16>, vector<256x256xbf16>, vector<16x256xf32> -> vector<16x256xf32>
      %28 = vector.broadcast %26 : vector<1x256xf32> to vector<16x256xf32>
      %29 = arith.addf %27, %28 : vector<16x256xf32>
      %cst_22 = arith.constant 0.000000e+00 : f32
      %30 = vector.broadcast %cst_22 : f32 to vector<16x256xf32>
      %31 = arith.cmpf ogt, %29, %30 : vector<16x256xf32>
      %cst_23 = arith.constant 0.000000e+00 : f32
      %32 = vector.broadcast %cst_23 : f32 to vector<16x256xf32>
      %33 = arith.minimumf %29, %32 : vector<16x256xf32>
      %34 = math.exp %33 : vector<16x256xf32>
      %cst_24 = arith.constant 1.000000e+00 : f32
      %35 = vector.broadcast %cst_24 : f32 to vector<16x256xf32>
      %36 = arith.subf %34, %35 : vector<16x256xf32>
      %37 = arith.select %31, %29, %36 : vector<16x256xi1>, vector<16x256xf32>
      %38 = arith.truncf %37 : vector<16x256xf32> to vector<16x256xbf16>
      %c0_25 = arith.constant 0 : index
      %c0_26 = arith.constant 0 : index
      %39 = vector.load %arg7[%c0_25, %c0_26] : memref<256x128xbf16, #tpu.memory_space<vmem>>, vector<256x128xbf16>
      %c0_27 = arith.constant 0 : index
      %c0_28 = arith.constant 0 : index
      %40 = vector.load %arg8[%c0_27, %c0_28] : memref<1x128xf32, #tpu.memory_space<vmem>>, vector<1x128xf32>
      %cst_29 = arith.constant dense<0.000000e+00> : vector<16x128xf32>
      %41 = tpu.matmul %38, %39, %cst_29 {dimension_numbers = #tpu.dot_dimension_numbers<[1], [0], [0], [1], [0, 0, 1, 1], [], []>} : vector<16x256xbf16>, vector<256x128xbf16>, vector<16x128xf32> -> vector<16x128xf32>
      %42 = vector.broadcast %40 : vector<1x128xf32> to vector<16x128xf32>
      %43 = arith.addf %41, %42 : vector<16x128xf32>
      %cst_30 = arith.constant 0.000000e+00 : f32
      %44 = vector.broadcast %cst_30 : f32 to vector<16x128xf32>
      %45 = arith.subf %44, %43 : vector<16x128xf32>
      %46 = math.exp %45 : vector<16x128xf32>
      %cst_31 = arith.constant 1.000000e+00 : f32
      %47 = vector.broadcast %cst_31 : f32 to vector<16x128xf32>
      %48 = arith.addf %47, %46 : vector<16x128xf32>
      %49 = tpu.reciprocal %48 {approx = true} : vector<16x128xf32> -> vector<16x128xf32>
      %cst_32 = arith.constant 0.000000e+00 : f32
      %cst_33 = arith.constant 1.000000e+00 : f32
      %50 = vector.broadcast %cst_32 : f32 to vector<16x128xf32>
      %51 = arith.maximumf %50, %49 : vector<16x128xf32>
      %52 = vector.broadcast %cst_33 : f32 to vector<16x128xf32>
      %53 = arith.minimumf %52, %51 : vector<16x128xf32>
      %c0_34 = arith.constant 0 : index
      %c0_35 = arith.constant 0 : index
      %54 = vector.load %arg9[%c0_34, %c0_35] : memref<16x128xf32, #tpu.memory_space<vmem>>, vector<16x128xf32>
      tpu.vector_store %arg9[%c0_34, %c0_35], %53 {strides = array<i32>} : memref<16x128xf32, #tpu.memory_space<vmem>>, vector<16x128xf32>,
    } else {
    }
    return
  }
  func.func @transform_0(%arg0: i32, %arg1: i32) -> (i32, i32) {
    %c0_i32 = arith.constant 0 : i32
    return %arg0, %arg1 : i32, i32
  }
  func.func @transform_1(%arg0: i32, %arg1: i32) -> (i32, i32) {
    %c0_i32 = arith.constant 0 : i32
    %c0_i32_0 = arith.constant 0 : i32
    return %arg1, %c0_i32 : i32, i32
  }
  func.func @transform_2(%arg0: i32, %arg1: i32) -> (i32, i32) {
    %c0_i32 = arith.constant 0 : i32
    %c0_i32_0 = arith.constant 0 : i32
    %c0_i32_1 = arith.constant 0 : i32
    return %c0_i32, %c0_i32_0 : i32, i32
  }
  func.func @transform_3(%arg0: i32, %arg1: i32) -> (i32, i32) {
    %c0_i32 = arith.constant 0 : i32
    %c0_i32_0 = arith.constant 0 : i32
    %c0_i32_1 = arith.constant 0 : i32
    return %c0_i32, %c0_i32_0 : i32, i32
  }
  func.func @transform_4(%arg0: i32, %arg1: i32) -> (i32, i32) {
    %c0_i32 = arith.constant 0 : i32
    %c0_i32_0 = arith.constant 0 : i32
    %c0_i32_1 = arith.constant 0 : i32
    return %c0_i32, %c0_i32_0 : i32, i32
  }
  func.func @transform_5(%arg0: i32, %arg1: i32) -> (i32, i32) {
    %c0_i32 = arith.constant 0 : i32
    %c0_i32_0 = arith.constant 0 : i32
    %c0_i32_1 = arith.constant 0 : i32
    return %c0_i32, %c0_i32_0 : i32, i32
  }
  func.func @transform_6(%arg0: i32, %arg1: i32) -> (i32, i32) {
    %c0_i32 = arith.constant 0 : i32
    %c0_i32_0 = arith.constant 0 : i32
    %c0_i32_1 = arith.constant 0 : i32
    return %c0_i32, %c0_i32_0 : i32, i32
  }
  func.func @transform_7(%arg0: i32, %arg1: i32) -> (i32, i32) {
    %c0_i32 = arith.constant 0 : i32
    %c0_i32_0 = arith.constant 0 : i32
    return %arg0, %c0_i32 : i32, i32
  }
}

</mosaic_0001>

<llo_original>
// kernel: tpu_custom_call.1
$region0: #{tpu_custom_call.1}
  #allocation0 [shape = 'u32[]', space=smem, size = 0x4, offset = 0x4, fixed_abs, tag = 'smem constant byte address 0x4 - core index']
  #allocation1 [shape = 'u32[144,128]{1,0:T(1,128)}', space=vmem, size = 0x12000, scoped, tag = 'internal scratch']
  #allocation2 [shape = 'f32[16,256]{1,0:T(8,128)}', space=vmem, size = 0x4000, scoped, tag = 'scratch operand']
  %s0 = inlined_call_operand.hbm [shape: bf16[16,128], index: 0, kind: input, shape index: {}]
  %s1 = inlined_call_operand.hbm [shape: bf16[128,256], index: 1, kind: input, shape index: {}]
  %s2 = inlined_call_operand.vmem [shape: f32[1,256], index: 2, kind: input, shape index: {}]
  %s3 = inlined_call_operand.hbm [shape: bf16[256,256], index: 3, kind: input, shape index: {}]
  %s4 = inlined_call_operand.vmem [shape: f32[1,256], index: 4, kind: input, shape index: {}]
  %s5 = inlined_call_operand.hbm [shape: bf16[256,128], index: 5, kind: input, shape index: {}]
  %s6 = inlined_call_operand.vmem [shape: f32[1,128], index: 6, kind: input, shape index: {}]
  %s7 = inlined_call_operand.hbm [shape: f32[16,128], index: 7, kind: output, shape index: {}]
  %s8 = sld [smem:[#allocation0]]
  $region62: #{tpu_custom_call.1} parent=0
    _
  %s10 = ssub.s32 1, %s8
  %s11 = scalar_select 0, %s10, %s8
  $region1: #{tpu_custom_call.1} parent=0
    #allocation3 [shape = 'u8[4096]{0}', space=vmem, size = 0x1000, scoped, tag = 'input window, operand 0, single buffered']
    #allocation4 [shape = 's32[1]{0}', space=sflag, size = 0x4, scoped, tag = 'scoped memory for tpu_custom_call.1']
    #allocation5 [shape = 's32[1]{0}', space=sflag, size = 0x4, scoped, tag = 'scoped memory for tpu_custom_call.1']
    #allocation6 [shape = 'u8[65536]{0}', space=vmem, size = 0x10000, scoped, tag = 'input window, operand 1, single buffered']
    #allocation7 [shape = 's32[1]{0}', space=sflag, size = 0x4, scoped, tag = 'scoped memory for tpu_custom_call.1']
    #allocation8 [shape = 'u8[131072]{0}', space=vmem, size = 0x20000, scoped, tag = 'input window, operand 3, single buffered']
    #allocation9 [shape = 'u8[65536]{0}', space=vmem, size = 0x10000, scoped, tag = 'input window, operand 5, single buffered']
    #allocation10 [shape = 's32[1]{0}', space=sflag, size = 0x4, scoped, tag = 'scoped memory for tpu_custom_call.1']
    #allocation11 [shape = 'u8[8192]{0}', space=vmem, size = 0x2000, scoped, tag = 'output window, operand 0, single buffered']
    %12 = vsyncpa [#allocation4], 0
    %13 = vsyncpa [#allocation7], 0
    %14 = vsyncpa [#allocation10], 0
    %15 = vsyncpa [#allocation5], 0
    // Predicated region
    $region2: #{tpu_custom_call.1} parent=1 // pred_check
      _
    $region3: #{tpu_custom_call.1} parent=1 // pred_check_branch
      %17 = sbr.rel (0) target = $region5
    $region4: #{tpu_custom_call.1} parent=1 // pred_region
      %s19 = ssub.s32 128, 128
      %20 = vsyncadd [#allocation4], %s19
      %s21 = sshll.u32 [#allocation3], 4
      %s22 = int_to_ptr.vmem [resolvable:$true] %s21
      %27 = dma.hbm_to_vmem [thread:$0]  %s0, 128, %s22, [#allocation4], 64, 64, 4
    $region5: #{tpu_custom_call.1} parent=1 // pred_fallthru
      _
    // Predicated region
    $region6: #{tpu_custom_call.1} parent=1 // pred_check
      _
    $region7: #{tpu_custom_call.1} parent=1 // pred_check_branch
      %29 = sbr.rel (0) target = $region9
    $region8: #{tpu_custom_call.1} parent=1 // pred_region
      %s31 = ssub.s32 2048, 2048
      %32 = vsyncadd [#allocation7], %s31
      %s33 = sshll.u32 [#allocation6], 4
      %s34 = int_to_ptr.vmem [resolvable:$true] %s33
      %39 = dma.hbm_to_vmem [thread:$0]  %s1, 2048, %s34, [#allocation7], 128, 128, 8
    $region9: #{tpu_custom_call.1} parent=1 // pred_fallthru
      _
    // Predicated region
    $region10: #{tpu_custom_call.1} parent=1 // pred_check
      _
    $region11: #{tpu_custom_call.1} parent=1 // pred_check_branch
      %41 = sbr.rel (0) target = $region13
    $region12: #{tpu_custom_call.1} parent=1 // pred_region
      _
    $region13: #{tpu_custom_call.1} parent=1 // pred_fallthru
      _
    // Predicated region
    $region14: #{tpu_custom_call.1} parent=1 // pred_check
      _
    $region15: #{tpu_custom_call.1} parent=1 // pred_check_branch
      %43 = sbr.rel (0) target = $region17
    $region16: #{tpu_custom_call.1} parent=1 // pred_region
      %s45 = ssub.s32 4096, 4096
      %46 = vsyncadd [#allocation7], %s45
      %s47 = sshll.u32 [#allocation8], 4
      %s48 = int_to_ptr.vmem [resolvable:$true] %s47
      %53 = dma.hbm_to_vmem [thread:$0]  %s3, 4096, %s48, [#allocation7], 128, 128, 8
    $region17: #{tpu_custom_call.1} parent=1 // pred_fallthru
      _
    // Predicated region
    $region18: #{tpu_custom_call.1} parent=1 // pred_check
      _
    $region19: #{tpu_custom_call.1} parent=1 // pred_check_branch
      %55 = sbr.rel (0) target = $region21
    $region20: #{tpu_custom_call.1} parent=1 // pred_region
      _
    $region21: #{tpu_custom_call.1} parent=1 // pred_fallthru
      _
    // Predicated region
    $region22: #{tpu_custom_call.1} parent=1 // pred_check
      _
    $region23: #{tpu_custom_call.1} parent=1 // pred_check_branch
      %57 = sbr.rel (0) target = $region25
    $region24: #{tpu_custom_call.1} parent=1 // pred_region
      %s59 = ssub.s32 2048, 2048
      %60 = vsyncadd [#allocation10], %s59
      %s61 = sshll.u32 [#allocation9], 4
      %s62 = int_to_ptr.vmem [resolvable:$true] %s61
      %67 = dma.hbm_to_vmem [thread:$0]  %s5, 2048, %s62, [#allocation10], 64, 64, 4
    $region25: #{tpu_custom_call.1} parent=1 // pred_fallthru
      _
    // Predicated region
    $region26: #{tpu_custom_call.1} parent=1 // pred_check
      _
    $region27: #{tpu_custom_call.1} parent=1 // pred_check_branch
      %69 = sbr.rel (0) target = $region29
    $region28: #{tpu_custom_call.1} parent=1 // pred_region
      _
    $region29: #{tpu_custom_call.1} parent=1 // pred_fallthru
      _
    // Predicated region
    $region30: #{tpu_custom_call.1} parent=1 // pred_check
      _
    $region31: #{tpu_custom_call.1} parent=1 // pred_check_branch
      %71 = sbr.rel (0) target = $region33
    $region32: #{tpu_custom_call.1} parent=1 // pred_region
      %72 = dma.done [#allocation4], 128
    $region33: #{tpu_custom_call.1} parent=1 // pred_fallthru
      _
    // Predicated region
    $region34: #{tpu_custom_call.1} parent=1 // pred_check
      _
    $region35: #{tpu_custom_call.1} parent=1 // pred_check_branch
      %74 = sbr.rel (0) target = $region37
    $region36: #{tpu_custom_call.1} parent=1 // pred_region
      %75 = dma.done [#allocation7], 2048
    $region37: #{tpu_custom_call.1} parent=1 // pred_fallthru
      _
    // Predicated region
    $region38: #{tpu_custom_call.1} parent=1 // pred_check
      _
    $region39: #{tpu_custom_call.1} parent=1 // pred_check_branch
      %77 = sbr.rel (0) target = $region41
    $region40: #{tpu_custom_call.1} parent=1 // pred_region
      %78 = dma.done [#allocation7], 4096
    $region41: #{tpu_custom_call.1} parent=1 // pred_fallthru
      _
    // Predicated region
    $region42: #{tpu_custom_call.1} parent=1 // pred_check
      _
    $region43: #{tpu_custom_call.1} parent=1 // pred_check_branch
      %80 = sbr.rel (0) target = $region45
    $region44: #{tpu_custom_call.1} parent=1 // pred_region
      %81 = dma.done [#allocation10], 2048
    $region45: #{tpu_custom_call.1} parent=1 // pred_fallthru
      _
    %p83 = scmp.eq.s32.totalorder 0, 0
    // Predicated region
    $region46: #{tpu_custom_call.1} parent=1 // pred_check
      %p84 = pneg %p83
    $region47: #{tpu_custom_call.1} parent=1 // pred_check_branch
      %86 = sbr.rel (%p84) target = $region49
    $region48: #{tpu_custom_call.1} parent=1 // pred_region
      %87 = vst [vmem:[#allocation2] sm:$0xff] 0.0
      %88 = vst [vmem:[#allocation2 + $0x8] sm:$0xff] 0.0
      %89 = vst [vmem:[#allocation2 + $0x10] sm:$0xff] 0.0
      %90 = vst [vmem:[#allocation2 + $0x18] sm:$0xff] 0.0
    $region49: #{tpu_custom_call.1} parent=1 // pred_fallthru
      _
    %v91 = vld [vmem:[#allocation2] sm:$0xff]
    %v92 = vld [vmem:[#allocation2 + $0x8] sm:$0xff]
    %v93 = vld [vmem:[#allocation2 + $0x10] sm:$0xff]
    %v94 = vld [vmem:[#allocation2 + $0x18] sm:$0xff]
    %v95 = vld [vmem:[#allocation3] sm:$0xf]
    %v96 = vld [vmem:[#allocation3 + $0x4] sm:$0xf]
    %v97 = vld [vmem:[#allocation6] sm:$0xff]
    %v98 = vld [vmem:[#allocation6 + $0x8] sm:$0xff]
    %v99 = vld [vmem:[#allocation6 + $0x10] sm:$0xff]
    %v100 = vld [vmem:[#allocation6 + $0x18] sm:$0xff]
    %v101 = vld [vmem:[#allocation6 + $0x20] sm:$0xff]
    %v102 = vld [vmem:[#allocation6 + $0x28] sm:$0xff]
    %v103 = vld [vmem:[#allocation6 + $0x30] sm:$0xff]
    %v104 = vld [vmem:[#allocation6 + $0x38] sm:$0xff]
    %v105 = vld [vmem:[#allocation6 + $0x40] sm:$0xff]
    %v106 = vld [vmem:[#allocation6 + $0x48] sm:$0xff]
    %v107 = vld [vmem:[#allocation6 + $0x50] sm:$0xff]
    %v108 = vld [vmem:[#allocation6 + $0x58] sm:$0xff]
    %v109 = vld [vmem:[#allocation6 + $0x60] sm:$0xff]
    %v110 = vld [vmem:[#allocation6 + $0x68] sm:$0xff]
    %v111 = vld [vmem:[#allocation6 + $0x70] sm:$0xff]
    %v112 = vld [vmem:[#allocation6 + $0x78] sm:$0xff]
    %v115 = vunpack.c.l.b16 %v95
    %v116 = vunpack.c.l.b16 %v96
    %v117 = vpack.c.b16 %v116, %v115
    %v135 = vunpack.c.l.b16 %v97
    %v136 = vunpack.c.h.b16 %v97
    %v137 = vunpack.c.l.b16 %v98
    %v138 = vunpack.c.h.b16 %v98
    %v139 = vunpack.c.l.b16 %v99
    %v140 = vunpack.c.h.b16 %v99
    %v141 = vunpack.c.l.b16 %v100
    %v142 = vunpack.c.h.b16 %v100
    %v143 = vunpack.c.l.b16 %v101
    %v144 = vunpack.c.h.b16 %v101
    %v145 = vunpack.c.l.b16 %v102
    %v146 = vunpack.c.h.b16 %v102
    %v147 = vunpack.c.l.b16 %v103
    %v148 = vunpack.c.h.b16 %v103
    %v149 = vunpack.c.l.b16 %v104
    %v150 = vunpack.c.h.b16 %v104
    %v151 = vunpack.c.l.b16 %v105
    %v152 = vunpack.c.h.b16 %v105
    %v153 = vunpack.c.l.b16 %v106
    %v154 = vunpack.c.h.b16 %v106
    %v155 = vunpack.c.l.b16 %v107
    %v156 = vunpack.c.h.b16 %v107
    %v157 = vunpack.c.l.b16 %v108
    %v158 = vunpack.c.h.b16 %v108
    %v159 = vunpack.c.l.b16 %v109
    %v160 = vunpack.c.h.b16 %v109
    %v161 = vunpack.c.l.b16 %v110
    %v162 = vunpack.c.h.b16 %v110
    %v163 = vunpack.c.l.b16 %v111
    %v164 = vunpack.c.h.b16 %v111
    %v165 = vunpack.c.l.b16 %v112
    %v166 = vunpack.c.h.b16 %v112
    %v167 = vpack.c.b16 %v137, %v135
    %v168 = vpack.c.b16 %v138, %v136
    %v169 = vpack.c.b16 %v141, %v139
    %v170 = vpack.c.b16 %v142, %v140
    %v171 = vpack.c.b16 %v145, %v143
    %v172 = vpack.c.b16 %v146, %v144
    %v173 = vpack.c.b16 %v149, %v147
    %v174 = vpack.c.b16 %v150, %v148
    %v175 = vpack.c.b16 %v153, %v151
    %v176 = vpack.c.b16 %v154, %v152
    %v177 = vpack.c.b16 %v157, %v155
    %v178 = vpack.c.b16 %v158, %v156
    %v179 = vpack.c.b16 %v161, %v159
    %v180 = vpack.c.b16 %v162, %v160
    %v181 = vpack.c.b16 %v165, %v163
    %v182 = vpack.c.b16 %v166, %v164
    %199 = vmatprep.subr.bf16.mxu0 %v168
    %200 = vmatpush1.bf16.msra.mxu0 %v167
    %201 = vmatprep.subr.bf16.mxu0 %v170
    %202 = vmatpush1.bf16.msra.mxu0 %v169
    %203 = vmatprep.subr.bf16.mxu0 %v172
    %204 = vmatpush1.bf16.msra.mxu0 %v171
    %205 = vmatprep.subr.bf16.mxu0 %v174
    %206 = vmatpush1.bf16.msra.mxu0 %v173
    %207 = vmatprep.subr.bf16.mxu0 %v176
    %208 = vmatpush1.bf16.msra.mxu0 %v175
    %209 = vmatprep.subr.bf16.mxu0 %v178
    %210 = vmatpush1.bf16.msra.mxu0 %v177
    %211 = vmatprep.subr.bf16.mxu0 %v180
    %212 = vmatpush1.bf16.msra.mxu0 %v179
    %213 = vmatprep.subr.bf16.mxu0 %v182
    %214 = vmatpush1.bf16.msra.mxu0 %v181
    %215 = vmatprep.subr.bf16.mxu0 0
    %216 = vmatpush1.bf16.msra.mxu0 0
    %217 = vmatprep.subr.bf16.mxu0 0
    %218 = vmatpush1.bf16.msra.mxu0 0
    %219 = vmatprep.subr.bf16.mxu0 0
    %220 = vmatpush1.bf16.msra.mxu0 0
    %221 = vmatprep.subr.bf16.mxu0 0
    %222 = vmatpush1.bf16.msra.mxu0 0
    %223 = vmatprep.subr.bf16.mxu0 0
    %224 = vmatpush1.bf16.msra.mxu0 0
    %225 = vmatprep.subr.bf16.mxu0 0
    %226 = vmatpush1.bf16.msra.mxu0 0
    %227 = vmatprep.subr.bf16.mxu0 0
    %228 = vmatpush1.bf16.msra.mxu0 0
    %229 = vmatprep.subr.bf16.mxu0 0
    %230 = vmatpush1.bf16.msra.mxu0 0
    %231 = vmatprep.mubr.bf16.mxu0 0
    %232 = vmatmul.mubr.bf16.gmra.mrb[0].mxu0 %v117
    %v233 = vpop.f32.mrb[0].mxu0
    %v234 = vadd.f32 0.0, %v233
    %v235 = vpop.f32.mrb[0].mxu0
    %v236 = vadd.f32 0.0, %v235
    %v237 = vpop.f32.mrb[0].mxu0
    %v238 = vadd.f32 0.0, %v237
    %v239 = vpop.f32.mrb[0].mxu0
    %v240 = vadd.f32 0.0, %v239
    %241 = vdwg.mxu0
    %v242 = vadd.f32 %v91, %v234
    %v243 = vadd.f32 %v92, %v236
    %v244 = vadd.f32 %v93, %v238
    %v245 = vadd.f32 %v94, %v240
    %246 = vst [vmem:[#allocation2] sm:$0xff] %v242
    %247 = vst [vmem:[#allocation2 + $0x8] sm:$0xff] %v243
    %248 = vst [vmem:[#allocation2 + $0x10] sm:$0xff] %v244
    %249 = vst [vmem:[#allocation2 + $0x18] sm:$0xff] %v245
    // Predicated region
    $region50: #{tpu_custom_call.1} parent=1 // pred_check
      %p250 = pneg %p83
    $region51: #{tpu_custom_call.1} parent=1 // pred_check_branch
      %252 = sbr.rel (%p250) target = $region53
    $region52: #{tpu_custom_call.1} parent=1 // pred_region
      %v253 = vld [vmem:[#allocation2] sm:$0xff]
      %v254 = vld [vmem:[#allocation2 + $0x8] sm:$0xff]
      %v255 = vld [vmem:[#allocation2 + $0x10] sm:$0xff]
      %v256 = vld [vmem:[#allocation2 + $0x18] sm:$0xff]
      %v257 = vld [vmem:[%s2] sm:$0x3]
      %v259 = vlaneseq
      %v260 = vshrl.u32 %v259, 7
      %v261 = vsub.s32 0, %v260
      %v262 = vrot.slane %v257, %v261
      %v263 = vlaneseq
      %v264 = vshrl.u32 %v263, 7
      %v265 = vsub.s32 1, %v264
      %v266 = vrot.slane %v257, %v265
      %v269 = vadd.f32 %v253, %v262
      %v270 = vadd.f32 %v254, %v266
      %v271 = vadd.f32 %v255, %v262
      %v272 = vadd.f32 %v256, %v266
      %vm273 = vcmp.gt.f32.partialorder %v269, 0.0
      %vm274 = vcmp.gt.f32.partialorder %v270, 0.0
      %vm275 = vcmp.gt.f32.partialorder %v271, 0.0
      %vm276 = vcmp.gt.f32.partialorder %v272, 0.0
      %v277 = vmin.f32 %v269, 0.0
      %v278 = vmin.f32 %v270, 0.0
      %v279 = vmin.f32 %v271, 0.0
      %v280 = vmin.f32 %v272, 0.0
      %v281 = vmul.f32 %v277, 1.442695
      %v282 = vpow.pop %v281
      %v283 = vmul.f32 %v278, 1.442695
      %v284 = vpow.pop %v283
      %v285 = vmul.f32 %v279, 1.442695
      %v286 = vpow.pop %v285
      %v287 = vmul.f32 %v280, 1.442695
      %v288 = vpow.pop %v287
      %v289 = vsub.f32 %v282, 1.0
      %v290 = vsub.f32 %v284, 1.0
      %v291 = vsub.f32 %v286, 1.0
      %v292 = vsub.f32 %v288, 1.0
      %v293 = vsel %vm273, %v269, %v289
      %v294 = vsel %vm274, %v270, %v290
      %v295 = vsel %vm275, %v271, %v291
      %v296 = vsel %vm276, %v272, %v292
      %v297 = vpack.c.bf16 %v295, %v293
      %v298 = vpack.c.bf16 %v296, %v294
      %v299 = vld [vmem:[#allocation8] sm:$0xff]
      %v300 = vld [vmem:[#allocation8 + $0x8] sm:$0xff]
      %v301 = vld [vmem:[#allocation8 + $0x10] sm:$0xff]
      %v302 = vld [vmem:[#allocation8 + $0x18] sm:$0xff]
      %v303 = vld [vmem:[#allocation8 + $0x20] sm:$0xff]
      %v304 = vld [vmem:[#allocation8 + $0x28] sm:$0xff]
      %v305 = vld [vmem:[#allocation8 + $0x30] sm:$0xff]
      %v306 = vld [vmem:[#allocation8 + $0x38] sm:$0xff]
      %v307 = vld [vmem:[#allocation8 + $0x40] sm:$0xff]
      %v308 = vld [vmem:[#allocation8 + $0x48] sm:$0xff]
      %v309 = vld [vmem:[#allocation8 + $0x50] sm:$0xff]
      %v310 = vld [vmem:[#allocation8 + $0x58] sm:$0xff]
      %v311 = vld [vmem:[#allocation8 + $0x60] sm:$0xff]
      %v312 = vld [vmem:[#allocation8 + $0x68] sm:$0xff]
      %v313 = vld [vmem:[#allocation8 + $0x70] sm:$0xff]
      %v314 = vld [vmem:[#allocation8 + $0x78] sm:$0xff]
      %v315 = vld [vmem:[#allocation8 + $0x80] sm:$0xff]
      %v316 = vld [vmem:[#allocation8 + $0x88] sm:$0xff]
      %v317 = vld [vmem:[#allocation8 + $0x90] sm:$0xff]
      %v318 = vld [vmem:[#allocation8 + $0x98] sm:$0xff]
      %v319 = vld [vmem:[#allocation8 + $0xa0] sm:$0xff]
      %v320 = vld [vmem:[#allocation8 + $0xa8] sm:$0xff]
      %v321 = vld [vmem:[#allocation8 + $0xb0] sm:$0xff]
      %v322 = vld [vmem:[#allocation8 + $0xb8] sm:$0xff]
      %v323 = vld [vmem:[#allocation8 + $0xc0] sm:$0xff]
      %v324 = vld [vmem:[#allocation8 + $0xc8] sm:$0xff]
      %v325 = vld [vmem:[#allocation8 + $0xd0] sm:$0xff]
      %v326 = vld [vmem:[#allocation8 + $0xd8] sm:$0xff]
      %v327 = vld [vmem:[#allocation8 + $0xe0] sm:$0xff]
      %v328 = vld [vmem:[#allocation8 + $0xe8] sm:$0xff]
      %v329 = vld [vmem:[#allocation8 + $0xf0] sm:$0xff]
      %v330 = vld [vmem:[#allocation8 + $0xf8] sm:$0xff]
      %v331 = vld [vmem:[%s4] sm:$0x3]
      %v333 = vlaneseq
      %v334 = vshrl.u32 %v333, 7
      %v335 = vsub.s32 0, %v334
      %v336 = vrot.slane %v331, %v335
      %v337 = vlaneseq
      %v338 = vshrl.u32 %v337, 7
      %v339 = vsub.s32 1, %v338
      %v340 = vrot.slane %v331, %v339
      %v375 = vunpack.c.l.b16 %v299
      %v376 = vunpack.c.h.b16 %v299
      %v377 = vunpack.c.l.b16 %v300
      %v378 = vunpack.c.h.b16 %v300
      %v379 = vunpack.c.l.b16 %v301
      %v380 = vunpack.c.h.b16 %v301
      %v381 = vunpack.c.l.b16 %v302
      %v382 = vunpack.c.h.b16 %v302
      %v383 = vunpack.c.l.b16 %v303
      %v384 = vunpack.c.h.b16 %v303
      %v385 = vunpack.c.l.b16 %v304
      %v386 = vunpack.c.h.b16 %v304
      %v387 = vunpack.c.l.b16 %v305
      %v388 = vunpack.c.h.b16 %v305
      %v389 = vunpack.c.l.b16 %v306
      %v390 = vunpack.c.h.b16 %v306
      %v391 = vunpack.c.l.b16 %v307
      %v392 = vunpack.c.h.b16 %v307
      %v393 = vunpack.c.l.b16 %v308
      %v394 = vunpack.c.h.b16 %v308
      %v395 = vunpack.c.l.b16 %v309
      %v396 = vunpack.c.h.b16 %v309
      %v397 = vunpack.c.l.b16 %v310
      %v398 = vunpack.c.h.b16 %v310
      %v399 = vunpack.c.l.b16 %v311
      %v400 = vunpack.c.h.b16 %v311
      %v401 = vunpack.c.l.b16 %v312
      %v402 = vunpack.c.h.b16 %v312
      %v403 = vunpack.c.l.b16 %v313
      %v404 = vunpack.c.h.b16 %v313
      %v405 = vunpack.c.l.b16 %v314
      %v406 = vunpack.c.h.b16 %v314
      %v407 = vunpack.c.l.b16 %v315
      %v408 = vunpack.c.h.b16 %v315
      %v409 = vunpack.c.l.b16 %v316
      %v410 = vunpack.c.h.b16 %v316
      %v411 = vunpack.c.l.b16 %v317
      %v412 = vunpack.c.h.b16 %v317
      %v413 = vunpack.c.l.b16 %v318
      %v414 = vunpack.c.h.b16 %v318
      %v415 = vunpack.c.l.b16 %v319
      %v416 = vunpack.c.h.b16 %v319
      %v417 = vunpack.c.l.b16 %v320
      %v418 = vunpack.c.h.b16 %v320
      %v419 = vunpack.c.l.b16 %v321
      %v420 = vunpack.c.h.b16 %v321
      %v421 = vunpack.c.l.b16 %v322
      %v422 = vunpack.c.h.b16 %v322
      %v423 = vunpack.c.l.b16 %v323
      %v424 = vunpack.c.h.b16 %v323
      %v425 = vunpack.c.l.b16 %v324
      %v426 = vunpack.c.h.b16 %v324
      %v427 = vunpack.c.l.b16 %v325
      %v428 = vunpack.c.h.b16 %v325
      %v429 = vunpack.c.l.b16 %v326
      %v430 = vunpack.c.h.b16 %v326
      %v431 = vunpack.c.l.b16 %v327
      %v432 = vunpack.c.h.b16 %v327
      %v433 = vunpack.c.l.b16 %v328
      %v434 = vunpack.c.h.b16 %v328
      %v435 = vunpack.c.l.b16 %v329
      %v436 = vunpack.c.h.b16 %v329
      %v437 = vunpack.c.l.b16 %v330
      %v438 = vunpack.c.h.b16 %v330
      %v439 = vpack.c.b16 %v377, %v375
      %v440 = vpack.c.b16 %v378, %v376
      %v441 = vpack.c.b16 %v381, %v379
      %v442 = vpack.c.b16 %v382, %v380
      %v443 = vpack.c.b16 %v385, %v383
      %v444 = vpack.c.b16 %v386, %v384
      %v445 = vpack.c.b16 %v389, %v387
      %v446 = vpack.c.b16 %v390, %v388
      %v447 = vpack.c.b16 %v393, %v391
      %v448 = vpack.c.b16 %v394, %v392
      %v449 = vpack.c.b16 %v397, %v395
      %v450 = vpack.c.b16 %v398, %v396
      %v451 = vpack.c.b16 %v401, %v399
      %v452 = vpack.c.b16 %v402, %v400
      %v453 = vpack.c.b16 %v405, %v403
      %v454 = vpack.c.b16 %v406, %v404
      %v455 = vpack.c.b16 %v409, %v407
      %v456 = vpack.c.b16 %v410, %v408
      %v457 = vpack.c.b16 %v413, %v411
      %v458 = vpack.c.b16 %v414, %v412
      %v459 = vpack.c.b16 %v417, %v415
      %v460 = vpack.c.b16 %v418, %v416
      %v461 = vpack.c.b16 %v421, %v419
      %v462 = vpack.c.b16 %v422, %v420
      %v463 = vpack.c.b16 %v425, %v423
      %v464 = vpack.c.b16 %v426, %v424
      %v465 = vpack.c.b16 %v429, %v427
      %v466 = vpack.c.b16 %v430, %v428
      %v467 = vpack.c.b16 %v433, %v431
      %v468 = vpack.c.b16 %v434, %v432
      %v469 = vpack.c.b16 %v437, %v435
      %v470 = vpack.c.b16 %v438, %v436
      %503 = vmatprep.subr.bf16.mxu0 %v440
      %504 = vmatpush1.bf16.msra.mxu0 %v439
      %505 = vmatprep.subr.bf16.mxu0 %v442
      %506 = vmatpush1.bf16.msra.mxu0 %v441
      %507 = vmatprep.subr.bf16.mxu0 %v444
      %508 = vmatpush1.bf16.msra.mxu0 %v443
      %509 = vmatprep.subr.bf16.mxu0 %v446
      %510 = vmatpush1.bf16.msra.mxu0 %v445
      %511 = vmatprep.subr.bf16.mxu0 %v448
      %512 = vmatpush1.bf16.msra.mxu0 %v447
      %513 = vmatprep.subr.bf16.mxu0 %v450
      %514 = vmatpush1.bf16.msra.mxu0 %v449
      %515 = vmatprep.subr.bf16.mxu0 %v452
      %516 = vmatpush1.bf16.msra.mxu0 %v451
      %517 = vmatprep.subr.bf16.mxu0 %v454
      %518 = vmatpush1.bf16.msra.mxu0 %v453
      %519 = vmatprep.subr.bf16.mxu0 %v456
      %520 = vmatpush1.bf16.msra.mxu0 %v455
      %521 = vmatprep.subr.bf16.mxu0 %v458
      %522 = vmatpush1.bf16.msra.mxu0 %v457
      %523 = vmatprep.subr.bf16.mxu0 %v460
      %524 = vmatpush1.bf16.msra.mxu0 %v459
      %525 = vmatprep.subr.bf16.mxu0 %v462
      %526 = vmatpush1.bf16.msra.mxu0 %v461
      %527 = vmatprep.subr.bf16.mxu0 %v464
      %528 = vmatpush1.bf16.msra.mxu0 %v463
      %529 = vmatprep.subr.bf16.mxu0 %v466
      %530 = vmatpush1.bf16.msra.mxu0 %v465
      %531 = vmatprep.subr.bf16.mxu0 %v468
      %532 = vmatpush1.bf16.msra.mxu0 %v467
      %533 = vmatprep.subr.bf16.mxu0 %v470
      %534 = vmatpush1.bf16.msra.mxu0 %v469
      %535 = vmatprep.mubr.bf16.mxu0 %v298
      %536 = vmatmul.mubr.bf16.gmra.mrb[0].mxu0 %v297
      %v537 = vpop.f32.mrb[0].mxu0
      %v538 = vadd.f32 %v336, %v537
      %v539 = vpop.f32.mrb[0].mxu0
      %v540 = vadd.f32 %v340, %v539
      %v541 = vpop.f32.mrb[0].mxu0
      %v542 = vadd.f32 %v336, %v541
      %v543 = vpop.f32.mrb[0].mxu0
      %v544 = vadd.f32 %v340, %v543
      %545 = vdwg.mxu0
      %vm546 = vcmp.gt.f32.partialorder %v538, 0.0
      %vm547 = vcmp.gt.f32.partialorder %v540, 0.0
      %vm548 = vcmp.gt.f32.partialorder %v542, 0.0
      %vm549 = vcmp.gt.f32.partialorder %v544, 0.0
      %v550 = vmin.f32 %v538, 0.0
      %v551 = vmin.f32 %v540, 0.0
      %v552 = vmin.f32 %v542, 0.0
      %v553 = vmin.f32 %v544, 0.0
      %v554 = vmul.f32 %v550, 1.442695
      %v555 = vpow.pop %v554
      %v556 = vmul.f32 %v551, 1.442695
      %v557 = vpow.pop %v556
      %v558 = vmul.f32 %v552, 1.442695
      %v559 = vpow.pop %v558
      %v560 = vmul.f32 %v553, 1.442695
      %v561 = vpow.pop %v560
      %v562 = vsub.f32 %v555, 1.0
      %v563 = vsub.f32 %v557, 1.0
      %v564 = vsub.f32 %v559, 1.0
      %v565 = vsub.f32 %v561, 1.0
      %v566 = vsel %vm546, %v538, %v562
      %v567 = vsel %vm547, %v540, %v563
      %v568 = vsel %vm548, %v542, %v564
      %v569 = vsel %vm549, %v544, %v565
      %v570 = vpack.c.bf16 %v568, %v566
      %v571 = vpack.c.bf16 %v569, %v567
      %v572 = vld [vmem:[#allocation9] sm:$0xf]
      %v573 = vld [vmem:[#allocation9 + $0x4] sm:$0xf]
      %v574 = vld [vmem:[#allocation9 + $0x8] sm:$0xf]
      %v575 = vld [vmem:[#allocation9 + $0xc] sm:$0xf]
      %v576 = vld [vmem:[#allocation9 + $0x10] sm:$0xf]
      %v577 = vld [vmem:[#allocation9 + $0x14] sm:$0xf]
      %v578 = vld [vmem:[#allocation9 + $0x18] sm:$0xf]
      %v579 = vld [vmem:[#allocation9 + $0x1c] sm:$0xf]
      %v580 = vld [vmem:[#allocation9 + $0x20] sm:$0xf]
      %v581 = vld [vmem:[#allocation9 + $0x24] sm:$0xf]
      %v582 = vld [vmem:[#allocation9 + $0x28] sm:$0xf]
      %v583 = vld [vmem:[#allocation9 + $0x2c] sm:$0xf]
      %v584 = vld [vmem:[#allocation9 + $0x30] sm:$0xf]
      %v585 = vld [vmem:[#allocation9 + $0x34] sm:$0xf]
      %v586 = vld [vmem:[#allocation9 + $0x38] sm:$0xf]
      %v587 = vld [vmem:[#allocation9 + $0x3c] sm:$0xf]
      %v588 = vld [vmem:[#allocation9 + $0x40] sm:$0xf]
      %v589 = vld [vmem:[#allocation9 + $0x44] sm:$0xf]
      %v590 = vld [vmem:[#allocation9 + $0x48] sm:$0xf]
      %v591 = vld [vmem:[#allocation9 + $0x4c] sm:$0xf]
      %v592 = vld [vmem:[#allocation9 + $0x50] sm:$0xf]
      %v593 = vld [vmem:[#allocation9 + $0x54] sm:$0xf]
      %v594 = vld [vmem:[#allocation9 + $0x58] sm:$0xf]
      %v595 = vld [vmem:[#allocation9 + $0x5c] sm:$0xf]
      %v596 = vld [vmem:[#allocation9 + $0x60] sm:$0xf]
      %v597 = vld [vmem:[#allocation9 + $0x64] sm:$0xf]
      %v598 = vld [vmem:[#allocation9 + $0x68] sm:$0xf]
      %v599 = vld [vmem:[#allocation9 + $0x6c] sm:$0xf]
      %v600 = vld [vmem:[#allocation9 + $0x70] sm:$0xf]
      %v601 = vld [vmem:[#allocation9 + $0x74] sm:$0xf]
      %v602 = vld [vmem:[#allocation9 + $0x78] sm:$0xf]
      %v603 = vld [vmem:[#allocation9 + $0x7c] sm:$0xf]
      %v604 = vld [vmem:[%s6] sm:$0x1]
      %v606 = vlaneseq
      %v607 = vshrl.u32 %v606, 7
      %v608 = vsub.s32 0, %v607
      %v609 = vrot.slane %v604, %v608
      %v643 = vunpack.c.l.b16 %v572
      %v644 = vunpack.c.l.b16 %v573
      %v645 = vunpack.c.l.b16 %v574
      %v646 = vunpack.c.l.b16 %v575
      %v647 = vunpack.c.l.b16 %v576
      %v648 = vunpack.c.l.b16 %v577
      %v649 = vunpack.c.l.b16 %v578
      %v650 = vunpack.c.l.b16 %v579
      %v651 = vunpack.c.l.b16 %v580
      %v652 = vunpack.c.l.b16 %v581
      %v653 = vunpack.c.l.b16 %v582
      %v654 = vunpack.c.l.b16 %v583
      %v655 = vunpack.c.l.b16 %v584
      %v656 = vunpack.c.l.b16 %v585
      %v657 = vunpack.c.l.b16 %v586
      %v658 = vunpack.c.l.b16 %v587
      %v659 = vunpack.c.l.b16 %v588
      %v660 = vunpack.c.l.b16 %v589
      %v661 = vunpack.c.l.b16 %v590
      %v662 = vunpack.c.l.b16 %v591
      %v663 = vunpack.c.l.b16 %v592
      %v664 = vunpack.c.l.b16 %v593
      %v665 = vunpack.c.l.b16 %v594
      %v666 = vunpack.c.l.b16 %v595
      %v667 = vunpack.c.l.b16 %v596
      %v668 = vunpack.c.l.b16 %v597
      %v669 = vunpack.c.l.b16 %v598
      %v670 = vunpack.c.l.b16 %v599
      %v671 = vunpack.c.l.b16 %v600
      %v672 = vunpack.c.l.b16 %v601
      %v673 = vunpack.c.l.b16 %v602
      %v674 = vunpack.c.l.b16 %v603
      %v675 = vpack.c.b16 %v644, %v643
      %v676 = vpack.c.b16 %v646, %v645
      %v677 = vpack.c.b16 %v648, %v647
      %v678 = vpack.c.b16 %v650, %v649
      %v679 = vpack.c.b16 %v652, %v651
      %v680 = vpack.c.b16 %v654, %v653
      %v681 = vpack.c.b16 %v656, %v655
      %v682 = vpack.c.b16 %v658, %v657
      %v683 = vpack.c.b16 %v660, %v659
      %v684 = vpack.c.b16 %v662, %v661
      %v685 = vpack.c.b16 %v664, %v663
      %v686 = vpack.c.b16 %v666, %v665
      %v687 = vpack.c.b16 %v668, %v667
      %v688 = vpack.c.b16 %v670, %v669
      %v689 = vpack.c.b16 %v672, %v671
      %v690 = vpack.c.b16 %v674, %v673
      %707 = vmatprep.subr.bf16.mxu0 0
      %708 = vmatpush1.bf16.msra.mxu0 %v675
      %709 = vmatprep.subr.bf16.mxu0 0
      %710 = vmatpush1.bf16.msra.mxu0 %v676
      %711 = vmatprep.subr.bf16.mxu0 0
      %712 = vmatpush1.bf16.msra.mxu0 %v677
      %713 = vmatprep.subr.bf16.mxu0 0
      %714 = vmatpush1.bf16.msra.mxu0 %v678
      %715 = vmatprep.subr.bf16.mxu0 0
      %716 = vmatpush1.bf16.msra.mxu0 %v679
      %717 = vmatprep.subr.bf16.mxu0 0
      %718 = vmatpush1.bf16.msra.mxu0 %v680
      %719 = vmatprep.subr.bf16.mxu0 0
      %720 = vmatpush1.bf16.msra.mxu0 %v681
      %721 = vmatprep.subr.bf16.mxu0 0
      %722 = vmatpush1.bf16.msra.mxu0 %v682
      %723 = vmatprep.subr.bf16.mxu0 0
      %724 = vmatpush1.bf16.msra.mxu0 %v683
      %725 = vmatprep.subr.bf16.mxu0 0
      %726 = vmatpush1.bf16.msra.mxu0 %v684
      %727 = vmatprep.subr.bf16.mxu0 0
      %728 = vmatpush1.bf16.msra.mxu0 %v685
      %729 = vmatprep.subr.bf16.mxu0 0
      %730 = vmatpush1.bf16.msra.mxu0 %v686
      %731 = vmatprep.subr.bf16.mxu0 0
      %732 = vmatpush1.bf16.msra.mxu0 %v687
      %733 = vmatprep.subr.bf16.mxu0 0
      %734 = vmatpush1.bf16.msra.mxu0 %v688
      %735 = vmatprep.subr.bf16.mxu0 0
      %736 = vmatpush1.bf16.msra.mxu0 %v689
      %737 = vmatprep.subr.bf16.mxu0 0
      %738 = vmatpush1.bf16.msra.mxu0 %v690
      %739 = vmatprep.mubr.bf16.mxu0 %v571
      %740 = vmatmul.mubr.bf16.gmra.mrb[0].mxu0 %v570
      %v741 = vpop.f32.mrb[0].mxu0
      %v742 = vadd.f32 %v609, %v741
      %v743 = vpop.f32.mrb[0].mxu0
      %v744 = vpop.f32.mrb[0].mxu0
      %v745 = vadd.f32 %v609, %v744
      %v746 = vpop.f32.mrb[0].mxu0
      %747 = vdwg.mxu0
      %v748 = vsub.f32 0.0, %v742
      %v749 = vsub.f32 0.0, %v745
      %v750 = vmul.f32 %v748, 1.442695
      %v751 = vpow.pop %v750
      %v752 = vmul.f32 %v749, 1.442695
      %v753 = vpow.pop %v752
      %v754 = vadd.f32 %v751, 1.0
      %v755 = vadd.f32 %v753, 1.0
      %v756 = vrcp.pop %v754
      %v757 = vrcp.pop %v755
      %v758 = vmax.f32 %v756, 0.0
      %v759 = vmax.f32 %v757, 0.0
      %v760 = vmin.f32 %v758, 1.0
      %v761 = vmin.f32 %v759, 1.0
      %762 = vst [vmem:[#allocation11] sm:$0xff] %v760
      %763 = vst [vmem:[#allocation11 + $0x8] sm:$0xff] %v761
    $region53: #{tpu_custom_call.1} parent=1 // pred_fallthru
      _
    // Predicated region
    $region54: #{tpu_custom_call.1} parent=1 // pred_check
      _
    $region55: #{tpu_custom_call.1} parent=1 // pred_check_branch
      %765 = sbr.rel (0) target = $region57
    $region56: #{tpu_custom_call.1} parent=1 // pred_region
      %s767 = ssub.s32 256, 256
      %768 = vsyncadd [#allocation5], %s767
      %s769 = sshll.u32 [#allocation11], 4
      %s770 = int_to_ptr.vmem [resolvable:$true] %s769
      %775 = dma.vmem_to_hbm [thread:$0]  %s770, 256, %s7, [#allocation5], 128, 128, 8
    $region57: #{tpu_custom_call.1} parent=1 // pred_fallthru
      _
    // Predicated region
    $region58: #{tpu_custom_call.1} parent=1 // pred_check
      _
    $region59: #{tpu_custom_call.1} parent=1 // pred_check_branch
      %777 = sbr.rel (0) target = $region61
    $region60: #{tpu_custom_call.1} parent=1 // pred_region
      %778 = dma.done [#allocation5], 256
    $region61: #{tpu_custom_call.1} parent=1 // pred_fallthru
      _
    %779 = vsyncpa [#allocation4], 1
    %780 = vsyncpa [#allocation7], 1
    %781 = vsyncpa [#allocation10], 1
    %782 = vsyncpa [#allocation5], 1

</llo_original>
